<compile_context>
chip_gen: v7x
topology: tpu7x:2x2x1
jax: 0.10.0
libtpu: 0.0.40
codegen_flags: <defaults>
</compile_context>

<pallas_src>
import jax
import jax.numpy as jnp
from jax.experimental import pallas as pl
from jax.experimental.pallas import tpu as pltpu

_LANE = 128
_SUB = 8


def _fold_rows(p):
    """Fold (bb, tr, 128) f32 -> (bb, 8, 128) partial sums.

    When tr is a multiple of 8 this is pure VPU vreg adds (no cross-lane work).
    The remainder path (only reachable when the whole pixel extent fits in a
    single block) does one small sublane reduce and deposits it in sublane 0.
    """
    bbsz, tr, lanes = p.shape
    q, r = divmod(tr, _SUB)
    parts = []
    if q:
        head = p[:, : q * _SUB].reshape(bbsz, q, _SUB, lanes)
        parts.append(head.sum(axis=1))
    if r:
        tail = p[:, q * _SUB:].sum(axis=1)[:, None, :]              # (bb, 1, 128)
        sub = jax.lax.broadcasted_iota(jnp.int32, (1, _SUB, lanes), 1)
        parts.append(jnp.where(sub == 0, tail, jnp.float32(0.0)))   # (bb, 8, 128)
    out = parts[0]
    for extra in parts[1:]:
        out = out + extra
    return out


def _l_power_kernel(x_ref, y_ref, o_ref, px_acc, py_acc):
    # x_ref / y_ref : (bb, 3, tile_rows, 128) blocks in the *input* dtype.
    # o_ref         : (bb, 8, 128) f32, written only on the last reduction step.
    # px_acc/py_acc : (bb, 8, 128) f32 accumulators (persist across k steps).
    k = pl.program_id(1)

    @pl.when(k == 0)
    def _init():
        px_acc[...] = jnp.zeros_like(px_acc)
        py_acc[...] = jnp.zeros_like(py_acc)

    def tile_power(ref):
        v = ref[...].astype(jnp.float32)                            # (bb,3,tr,128)
        inten = 0.2 * v[:, 0] + 0.6 * v[:, 1] + 0.1 * v[:, 2]       # (bb,tr,128) VPU
        p = jnp.power(inten, jnp.float32(2.2))                      # EUP exp/log
        # 0**2.2 must be exactly 0 (also zeroes padded pixels on the fallback
        # path); negative intensities still propagate NaN like torch.pow.
        p = jnp.where(inten == 0.0, jnp.float32(0.0), p)
        return _fold_rows(p)

    # Pure elementwise per-tile accumulation into vreg-sized scratch.
    px_acc[...] += tile_power(x_ref)
    py_acc[...] += tile_power(y_ref)

    @pl.when(k == pl.num_programs(1) - 1)
    def _finalize():
        power_x = jnp.sum(px_acc[...], axis=(1, 2), keepdims=True)  # (bb,1,1)
        power_y = jnp.sum(py_acc[...], axis=(1, 2), keepdims=True)
        res = jnp.abs(jnp.float32(0.8)
                      - power_y / (power_x + jnp.float32(1e-6)))
        o_ref[...] = jnp.broadcast_to(res, o_ref.shape)


def _vmem_capacity_bytes():
    try:
        cap = int(pltpu.get_tpu_info().vmem_capacity_bytes)
        if cap > 0:
            return cap
    except Exception:
        pass
    return 64 * 1024 * 1024          # conservative default (v7x physical VMEM)


def _choose_tile_rows(rows, budget_rows):
    """Largest pixel-row tile that exactly divides `rows` (no partial blocks).

    Returns `rows` itself (single reduction step) when it fits the budget,
    otherwise the largest multiple-of-8 divisor of `rows` within budget, or
    None if no such tiling exists (caller falls back to the padded path).
    """
    if rows <= budget_rows:
        return rows
    t = (min(rows - 1, budget_rows) // _SUB) * _SUB
    while t >= _SUB:
        if rows % t == 0:
            return t
        t -= _SUB
    return None


def l_power(x, y, target_power=0.8, *, max_tile_rows=None):
    """Pallas TPU implementation of L_power.forward. Returns shape (b,) f32.

    NOTE: the PyTorch forward hard-codes 0.8 regardless of target_power; that
    literal behaviour is reproduced here (the argument is accepted-but-unused).
    """
    del target_power
    b, c, h, w = x.shape
    assert y.shape == x.shape, "x and y must have the same shape"
    assert c >= 3, "L_power needs at least 3 channels (R, G, B)"

    n_pix = h * w
    itemsize = jnp.dtype(x.dtype).itemsize

    # --- batch blocking ------------------------------------------------------
    # Largest divisor of b that is <= min(8, b // 2): amortizes per-grid-step
    # overhead for small images while keeping >= 2 batch blocks whenever
    # b >= 2, so the "parallel" batch axis can feed both v7x TensorCores.
    bb = 1
    if b > 1:
        for cand in range(min(8, b // 2), 0, -1):
            if b % cand == 0:
                bb = cand
                break
    n_b = b // bb

    # --- generation-aware VMEM / tile budget ----------------------------------
    vmem_cap = _vmem_capacity_bytes()
    per_tile_budget = min(5 * 1024 * 1024, vmem_cap // 12)  # per input per buffer
    # Budget in f32-equivalent bytes so in-kernel f32 intermediates also fit.
    row_bytes = bb * 3 * _LANE * max(itemsize, 4)
    budget_rows = max(1, per_tile_budget // row_bytes)
    if max_tile_rows is not None:
        budget_rows = min(budget_rows, int(max_tile_rows))

    # --- layout / tiling -------------------------------------------------------
    tile_rows = None
    rows = None
    if n_pix % _LANE == 0:
        rows = n_pix // _LANE
        tile_rows = _choose_tile_rows(rows, budget_rows)

    if tile_rows is not None:
        # Fast path: free reshape only — no extra HBM traffic. Channels >= 3
        # are excluded by the BlockSpec and never DMA'd.
        xin = x.reshape(b, c, rows, _LANE)
        yin = y.reshape(b, c, rows, _LANE)
    else:
        # Fallback for awkward pixel counts: one materializing prep pass
        # (slice to the 3 used channels + zero-pad the pixel axis). Padded
        # pixels have intensity 0 and contribute nothing to the power sum.
        rows_min = -(-n_pix // _LANE)
        rows_min8 = -(-rows_min // _SUB) * _SUB
        tile_rows = min(max(_SUB, (budget_rows // _SUB) * _SUB), rows_min8)
        n_k_fb = -(-rows_min8 // tile_rows)
        rows = n_k_fb * tile_rows
        padded_pix = rows * _LANE

        def prep(a):
            a3 = a[:, :3].reshape(b, 3, n_pix)
            a3 = jnp.pad(a3, ((0, 0), (0, 0), (0, padded_pix - n_pix)))
            return a3.reshape(b, 3, rows, _LANE)

        xin, yin = prep(x), prep(y)

    n_k = rows // tile_rows

    in_spec = pl.BlockSpec((bb, 3, tile_rows, _LANE),
                           lambda i, k: (i, 0, k, 0))
    out_spec = pl.BlockSpec((bb, _SUB, _LANE), lambda i, k: (i, 0, 0))

    tile_bytes = bb * 3 * tile_rows * _LANE * itemsize
    # 2 inputs x 2 pipeline buffers + accumulators + output buffers.
    ws_bytes = 4 * tile_bytes + 4 * bb * _SUB * _LANE * 4
    vmem_limit = int(min(vmem_cap - (16 << 20),
                         max(32 * 1024 * 1024, 2 * ws_bytes + (8 << 20))))
    vmem_limit = max(vmem_limit, ws_bytes + (8 << 20))

    out = pl.pallas_call(
        _l_power_kernel,
        out_shape=jax.ShapeDtypeStruct((b, _SUB, _LANE), jnp.float32),
        grid_spec=pltpu.PrefetchScalarGridSpec(
            num_scalar_prefetch=0,
            grid=(n_b, n_k),                          # reduction axis last
            in_specs=[in_spec, in_spec],
            out_specs=out_spec,
            scratch_shapes=[
                pltpu.VMEM((bb, _SUB, _LANE), jnp.float32),   # power_x partials
                pltpu.VMEM((bb, _SUB, _LANE), jnp.float32),   # power_y partials
            ],
        ),
        compiler_params=pltpu.CompilerParams(
            dimension_semantics=("parallel", "arbitrary"),
            vmem_limit_bytes=vmem_limit,
        ),
    )(xin, yin)
    return out[:, 0, 0]


def _reference(x, y):
    xf = x.astype(jnp.float32)
    yf = y.astype(jnp.float32)
    b = x.shape[0]
    ix = 0.2 * xf[:, 0] + 0.6 * xf[:, 1] + 0.1 * xf[:, 2]
    iy = 0.2 * yf[:, 0] + 0.6 * yf[:, 1] + 0.1 * yf[:, 2]
    px = jnp.sum(ix.reshape(b, -1) ** 2.2, axis=1)
    py = jnp.sum(iy.reshape(b, -1) ** 2.2, axis=1)
    return jnp.abs(0.8 - py / (px + 1e-6))


if __name__ == "__main__":
    key = jax.random.PRNGKey(0)
    k1, k2, k3, k4, k5, k6, k7, k8 = jax.random.split(key, 8)

    # Case 1: module-sized demo (b=2, c=4, 16x16) — fast no-copy path, channel
    # 3 never DMA'd, single reduction step, remainder-sublane fold path.
    x1 = jax.random.uniform(k1, (2, 4, 16, 16), dtype=jnp.float32)
    y1 = jax.random.uniform(k2, (2, 4, 16, 16), dtype=jnp.float32)
    out1 = jax.block_until_ready(l_power(x1, y1))
    ref1 = jax.block_until_ready(_reference(x1, y1))
    assert out1.shape == (2,)
    assert jnp.allclose(out1, ref1, atol=1e-4, rtol=1e-4), (out1, ref1)

    # Case 2: multi-step reduction (n_k > 1) via a forced small pixel tile.
    x2 = jax.random.uniform(k3, (2, 3, 64, 64), dtype=jnp.float32)
    y2 = jax.random.uniform(k4, (2, 3, 64, 64), dtype=jnp.float32)
    out2 = jax.block_until_ready(l_power(x2, y2, max_tile_rows=8))
    ref2 = jax.block_until_ready(_reference(x2, y2))
    assert jnp.allclose(out2, ref2, atol=1e-4, rtol=1e-4), (out2, ref2)

    # Case 3: bf16 inputs stay bf16 in HBM (cast in-kernel), batch-blocked
    # (bb=8, two parallel batch blocks).
    x3 = jax.random.uniform(k5, (16, 3, 32, 32), dtype=jnp.float32).astype(jnp.bfloat16)
    y3 = jax.random.uniform(k6, (16, 3, 32, 32), dtype=jnp.float32).astype(jnp.bfloat16)
    out3 = jax.block_until_ready(l_power(x3, y3))
    ref3 = jax.block_until_ready(_reference(x3, y3))
    assert jnp.allclose(out3, ref3, atol=1e-3, rtol=1e-3), (out3, ref3)

    # Case 4: pixel count not a multiple of 128 — exercises the zero-padding
    # fallback path (padded pixels contribute exactly 0).
    x4 = jax.random.uniform(k7, (3, 3, 15, 15), dtype=jnp.float32)
    y4 = jax.random.uniform(k8, (3, 3, 15, 15), dtype=jnp.float32)
    out4 = jax.block_until_ready(l_power(x4, y4))
    ref4 = jax.block_until_ready(_reference(x4, y4))
    assert jnp.allclose(out4, ref4, atol=1e-4, rtol=1e-4), (out4, ref4)

    print("KERNEL_OK")
</pallas_src>

<mosaic_0001>
module attributes {stable_mosaic.version = 11 : i64} {
  func.func @_l_power_kernel(%arg0: i32, %arg1: i32, %arg2: memref<1x3x2x128xf32, #tpu.memory_space<vmem>>, %arg3: memref<1x3x2x128xf32, #tpu.memory_space<vmem>>, %arg4: memref<1x8x128xf32, #tpu.memory_space<vmem>>, %arg5: memref<1x8x128xf32, #tpu.memory_space<vmem>>, %arg6: memref<1x8x128xf32, #tpu.memory_space<vmem>>) attributes {dimension_semantics = [#tpu.dimension_semantics<parallel>, #tpu.dimension_semantics<arbitrary>], iteration_bounds = array<i64: 2, 1>, scalar_prefetch = 0 : i64, scratch_operands = 2 : i64, tpu.core_type = #tpu.core_type<tc>, window_params = [{transform_indices = @transform_0, window_bounds = array<i64: 1, 3, 2, 128>}, {transform_indices = @transform_1, window_bounds = array<i64: 1, 3, 2, 128>}, {transform_indices = @transform_2, window_bounds = array<i64: 1, 8, 128>}]} {
    %c0_i32 = arith.constant 0 : i32
    %0 = arith.cmpi eq, %arg1, %c0_i32 : i32
    %1 = arith.extui %0 : i1 to i32
    %c0_i32_0 = arith.constant 0 : i32
    %2 = arith.cmpi ne, %1, %c0_i32_0 : i32
    scf.if %2 {
      %cst_39 = arith.constant 0.000000e+00 : f32
      %72 = vector.broadcast %cst_39 : f32 to vector<1x8x128xf32>
      %c0_40 = arith.constant 0 : index
      %c0_41 = arith.constant 0 : index
      %c0_42 = arith.constant 0 : index
      %73 = vector.load %arg5[%c0_40, %c0_41, %c0_42] : memref<1x8x128xf32, #tpu.memory_space<vmem>>, vector<1x8x128xf32>
      tpu.vector_store %arg5[%c0_40, %c0_41, %c0_42], %72 {strides = array<i32>} : memref<1x8x128xf32, #tpu.memory_space<vmem>>, vector<1x8x128xf32>,
      %cst_43 = arith.constant 0.000000e+00 : f32
      %74 = vector.broadcast %cst_43 : f32 to vector<1x8x128xf32>
      %c0_44 = arith.constant 0 : index
      %c0_45 = arith.constant 0 : index
      %c0_46 = arith.constant 0 : index
      %75 = vector.load %arg6[%c0_44, %c0_45, %c0_46] : memref<1x8x128xf32, #tpu.memory_space<vmem>>, vector<1x8x128xf32>
      tpu.vector_store %arg6[%c0_44, %c0_45, %c0_46], %74 {strides = array<i32>} : memref<1x8x128xf32, #tpu.memory_space<vmem>>, vector<1x8x128xf32>,
    } else {
    }
    %c0 = arith.constant 0 : index
    %c0_1 = arith.constant 0 : index
    %c0_2 = arith.constant 0 : index
    %3 = vector.load %arg5[%c0, %c0_1, %c0_2] : memref<1x8x128xf32, #tpu.memory_space<vmem>>, vector<1x8x128xf32>
    %c0_3 = arith.constant 0 : index
    %c0_4 = arith.constant 0 : index
    %c0_5 = arith.constant 0 : index
    %c0_6 = arith.constant 0 : index
    %4 = vector.load %arg2[%c0_3, %c0_4, %c0_5, %c0_6] : memref<1x3x2x128xf32, #tpu.memory_space<vmem>>, vector<1x3x2x128xf32>
    %5 = vector.extract_strided_slice %4 {offsets = [0, 0, 0, 0], sizes = [1, 1, 2, 128], strides = [1, 1, 1, 1]} : vector<1x3x2x128xf32> to vector<1x1x2x128xf32>
    %6 = vector.shape_cast %5 : vector<1x1x2x128xf32> to vector<1x2x128xf32>
    %cst = arith.constant 2.000000e-01 : f32
    %7 = vector.broadcast %cst : f32 to vector<1x2x128xf32>
    %8 = arith.mulf %7, %6 : vector<1x2x128xf32>
    %9 = vector.extract_strided_slice %4 {offsets = [0, 1, 0, 0], sizes = [1, 1, 2, 128], strides = [1, 1, 1, 1]} : vector<1x3x2x128xf32> to vector<1x1x2x128xf32>
    %10 = vector.shape_cast %9 : vector<1x1x2x128xf32> to vector<1x2x128xf32>
    %cst_7 = arith.constant 6.000000e-01 : f32
    %11 = vector.broadcast %cst_7 : f32 to vector<1x2x128xf32>
    %12 = arith.mulf %11, %10 : vector<1x2x128xf32>
    %13 = arith.addf %8, %12 : vector<1x2x128xf32>
    %14 = vector.extract_strided_slice %4 {offsets = [0, 2, 0, 0], sizes = [1, 1, 2, 128], strides = [1, 1, 1, 1]} : vector<1x3x2x128xf32> to vector<1x1x2x128xf32>
    %15 = vector.shape_cast %14 : vector<1x1x2x128xf32> to vector<1x2x128xf32>
    %cst_8 = arith.constant 1.000000e-01 : f32
    %16 = vector.broadcast %cst_8 : f32 to vector<1x2x128xf32>
    %17 = arith.mulf %16, %15 : vector<1x2x128xf32>
    %18 = arith.addf %13, %17 : vector<1x2x128xf32>
    %cst_9 = arith.constant 2.200000e+00 : f32
    %19 = vector.broadcast %cst_9 : f32 to vector<1x2x128xf32>
    %20 = math.powf %18, %19 : vector<1x2x128xf32>
    %cst_10 = arith.constant 0.000000e+00 : f32
    %21 = vector.broadcast %cst_10 : f32 to vector<1x2x128xf32>
    %22 = arith.cmpf oeq, %18, %21 : vector<1x2x128xf32>
    %cst_11 = arith.constant 0.000000e+00 : f32
    %23 = vector.broadcast %cst_11 : f32 to vector<1x2x128xf32>
    %24 = arith.select %22, %23, %20 : vector<1x2x128xi1>, vector<1x2x128xf32>
    %cst_12 = arith.constant dense<0.000000e+00> : vector<1x128xf32>
    %25 = vector.multi_reduction <add>, %24, %cst_12 [1] : vector<1x2x128xf32> to vector<1x128xf32>
    %26 = vector.shape_cast %25 : vector<1x128xf32> to vector<1x1x128xf32>
    %27 = tpu.iota {dimensions = array<i32: 1>} : vector<1x8x128xi32>
    %c0_i32_13 = arith.constant 0 : i32
    %28 = vector.broadcast %c0_i32_13 : i32 to vector<1x8x128xi32>
    %29 = arith.cmpi eq, %27, %28 : vector<1x8x128xi32>
    %cst_14 = arith.constant 0.000000e+00 : f32
    %30 = vector.shape_cast %26 : vector<1x1x128xf32> to vector<1x1x128xf32>
    %31 = vector.broadcast %30 : vector<1x1x128xf32> to vector<1x8x128xf32>
    %32 = vector.broadcast %cst_14 : f32 to vector<1x8x128xf32>
    %33 = arith.select %29, %31, %32 : vector<1x8x128xi1>, vector<1x8x128xf32>
    %34 = arith.addf %3, %33 : vector<1x8x128xf32>
    %c0_15 = arith.constant 0 : index
    %c0_16 = arith.constant 0 : index
    %c0_17 = arith.constant 0 : index
    %35 = vector.load %arg5[%c0_15, %c0_16, %c0_17] : memref<1x8x128xf32, #tpu.memory_space<vmem>>, vector<1x8x128xf32>
    tpu.vector_store %arg5[%c0_15, %c0_16, %c0_17], %34 {strides = array<i32>} : memref<1x8x128xf32, #tpu.memory_space<vmem>>, vector<1x8x128xf32>,
    %c0_18 = arith.constant 0 : index
    %c0_19 = arith.constant 0 : index
    %c0_20 = arith.constant 0 : index
    %36 = vector.load %arg6[%c0_18, %c0_19, %c0_20] : memref<1x8x128xf32, #tpu.memory_space<vmem>>, vector<1x8x128xf32>
    %c0_21 = arith.constant 0 : index
    %c0_22 = arith.constant 0 : index
    %c0_23 = arith.constant 0 : index
    %c0_24 = arith.constant 0 : index
    %37 = vector.load %arg3[%c0_21, %c0_22, %c0_23, %c0_24] : memref<1x3x2x128xf32, #tpu.memory_space<vmem>>, vector<1x3x2x128xf32>
    %38 = vector.extract_strided_slice %37 {offsets = [0, 0, 0, 0], sizes = [1, 1, 2, 128], strides = [1, 1, 1, 1]} : vector<1x3x2x128xf32> to vector<1x1x2x128xf32>
    %39 = vector.shape_cast %38 : vector<1x1x2x128xf32> to vector<1x2x128xf32>
    %cst_25 = arith.constant 2.000000e-01 : f32
    %40 = vector.broadcast %cst_25 : f32 to vector<1x2x128xf32>
    %41 = arith.mulf %40, %39 : vector<1x2x128xf32>
    %42 = vector.extract_strided_slice %37 {offsets = [0, 1, 0, 0], sizes = [1, 1, 2, 128], strides = [1, 1, 1, 1]} : vector<1x3x2x128xf32> to vector<1x1x2x128xf32>
    %43 = vector.shape_cast %42 : vector<1x1x2x128xf32> to vector<1x2x128xf32>
    %cst_26 = arith.constant 6.000000e-01 : f32
    %44 = vector.broadcast %cst_26 : f32 to vector<1x2x128xf32>
    %45 = arith.mulf %44, %43 : vector<1x2x128xf32>
    %46 = arith.addf %41, %45 : vector<1x2x128xf32>
    %47 = vector.extract_strided_slice %37 {offsets = [0, 2, 0, 0], sizes = [1, 1, 2, 128], strides = [1, 1, 1, 1]} : vector<1x3x2x128xf32> to vector<1x1x2x128xf32>
    %48 = vector.shape_cast %47 : vector<1x1x2x128xf32> to vector<1x2x128xf32>
    %cst_27 = arith.constant 1.000000e-01 : f32
    %49 = vector.broadcast %cst_27 : f32 to vector<1x2x128xf32>
    %50 = arith.mulf %49, %48 : vector<1x2x128xf32>
    %51 = arith.addf %46, %50 : vector<1x2x128xf32>
    %cst_28 = arith.constant 2.200000e+00 : f32
    %52 = vector.broadcast %cst_28 : f32 to vector<1x2x128xf32>
    %53 = math.powf %51, %52 : vector<1x2x128xf32>
    %cst_29 = arith.constant 0.000000e+00 : f32
    %54 = vector.broadcast %cst_29 : f32 to vector<1x2x128xf32>
    %55 = arith.cmpf oeq, %51, %54 : vector<1x2x128xf32>
    %cst_30 = arith.constant 0.000000e+00 : f32
    %56 = vector.broadcast %cst_30 : f32 to vector<1x2x128xf32>
    %57 = arith.select %55, %56, %53 : vector<1x2x128xi1>, vector<1x2x128xf32>
    %cst_31 = arith.constant dense<0.000000e+00> : vector<1x128xf32>
    %58 = vector.multi_reduction <add>, %57, %cst_31 [1] : vector<1x2x128xf32> to vector<1x128xf32>
    %59 = vector.shape_cast %58 : vector<1x128xf32> to vector<1x1x128xf32>
    %60 = tpu.iota {dimensions = array<i32: 1>} : vector<1x8x128xi32>
    %c0_i32_32 = arith.constant 0 : i32
    %61 = vector.broadcast %c0_i32_32 : i32 to vector<1x8x128xi32>
    %62 = arith.cmpi eq, %60, %61 : vector<1x8x128xi32>
    %cst_33 = arith.constant 0.000000e+00 : f32
    %63 = vector.shape_cast %59 : vector<1x1x128xf32> to vector<1x1x128xf32>
    %64 = vector.broadcast %63 : vector<1x1x128xf32> to vector<1x8x128xf32>
    %65 = vector.broadcast %cst_33 : f32 to vector<1x8x128xf32>
    %66 = arith.select %62, %64, %65 : vector<1x8x128xi1>, vector<1x8x128xf32>
    %67 = arith.addf %36, %66 : vector<1x8x128xf32>
    %c0_34 = arith.constant 0 : index
    %c0_35 = arith.constant 0 : index
    %c0_36 = arith.constant 0 : index
    %68 = vector.load %arg6[%c0_34, %c0_35, %c0_36] : memref<1x8x128xf32, #tpu.memory_space<vmem>>, vector<1x8x128xf32>
    tpu.vector_store %arg6[%c0_34, %c0_35, %c0_36], %67 {strides = array<i32>} : memref<1x8x128xf32, #tpu.memory_space<vmem>>, vector<1x8x128xf32>,
    %c0_i32_37 = arith.constant 0 : i32
    %69 = arith.cmpi eq, %arg1, %c0_i32_37 : i32
    %70 = arith.extui %69 : i1 to i32
    %c0_i32_38 = arith.constant 0 : i32
    %71 = arith.cmpi ne, %70, %c0_i32_38 : i32
    scf.if %71 {
      %c0_39 = arith.constant 0 : index
      %c0_40 = arith.constant 0 : index
      %c0_41 = arith.constant 0 : index
      %72 = vector.load %arg5[%c0_39, %c0_40, %c0_41] : memref<1x8x128xf32, #tpu.memory_space<vmem>>, vector<1x8x128xf32>
      %cst_42 = arith.constant dense<0.000000e+00> : vector<1xf32>
      %73 = vector.multi_reduction <add>, %72, %cst_42 [1, 2] : vector<1x8x128xf32> to vector<1xf32>
      %74 = vector.shape_cast %73 : vector<1xf32> to vector<1x1x1xf32>
      %c0_43 = arith.constant 0 : index
      %c0_44 = arith.constant 0 : index
      %c0_45 = arith.constant 0 : index
      %75 = vector.load %arg6[%c0_43, %c0_44, %c0_45] : memref<1x8x128xf32, #tpu.memory_space<vmem>>, vector<1x8x128xf32>
      %cst_46 = arith.constant dense<0.000000e+00> : vector<1xf32>
      %76 = vector.multi_reduction <add>, %75, %cst_46 [1, 2] : vector<1x8x128xf32> to vector<1xf32>
      %77 = vector.shape_cast %76 : vector<1xf32> to vector<1x1x1xf32>
      %cst_47 = arith.constant 9.99999997E-7 : f32
      %78 = vector.broadcast %cst_47 : f32 to vector<1x1x1xf32>
      %79 = arith.addf %74, %78 : vector<1x1x1xf32>
      %80 = arith.divf %77, %79 : vector<1x1x1xf32>
      %cst_48 = arith.constant 8.000000e-01 : f32
      %81 = vector.broadcast %cst_48 : f32 to vector<1x1x1xf32>
      %82 = arith.subf %81, %80 : vector<1x1x1xf32>
      %83 = math.absf %82 : vector<1x1x1xf32>
      %84 = vector.shape_cast %83 : vector<1x1x1xf32> to vector<1x1x1xf32>
      %85 = vector.broadcast %84 : vector<1x1x1xf32> to vector<1x8x128xf32>
      %c0_49 = arith.constant 0 : index
      %c0_50 = arith.constant 0 : index
      %c0_51 = arith.constant 0 : index
      %86 = vector.load %arg4[%c0_49, %c0_50, %c0_51] : memref<1x8x128xf32, #tpu.memory_space<vmem>>, vector<1x8x128xf32>
      tpu.vector_store %arg4[%c0_49, %c0_50, %c0_51], %85 {strides = array<i32>} : memref<1x8x128xf32, #tpu.memory_space<vmem>>, vector<1x8x128xf32>,
    } else {
    }
    return
  }
  func.func @transform_0(%arg0: i32, %arg1: i32) -> (i32, i32, i32, i32) {
    %c0_i32 = arith.constant 0 : i32
    %c0_i32_0 = arith.constant 0 : i32
    %c0_i32_1 = arith.constant 0 : i32
    return %arg0, %c0_i32, %arg1, %c0_i32_0 : i32, i32, i32, i32
  }
  func.func @transform_1(%arg0: i32, %arg1: i32) -> (i32, i32, i32, i32) {
    %c0_i32 = arith.constant 0 : i32
    %c0_i32_0 = arith.constant 0 : i32
    %c0_i32_1 = arith.constant 0 : i32
    return %arg0, %c0_i32, %arg1, %c0_i32_0 : i32, i32, i32, i32
  }
  func.func @transform_2(%arg0: i32, %arg1: i32) -> (i32, i32, i32) {
    %c0_i32 = arith.constant 0 : i32
    %c0_i32_0 = arith.constant 0 : i32
    %c0_i32_1 = arith.constant 0 : i32
    return %arg0, %c0_i32, %c0_i32_0 : i32, i32, i32
  }
}

</mosaic_0001>

<llo_original>
// kernel: tpu_custom_call.1
$region0: #{tpu_custom_call.1}
  #allocation0 [shape = 'u32[]', space=smem, size = 0x4, offset = 0x4, fixed_abs, tag = 'smem constant byte address 0x4 - core index']
  #allocation1 [shape = 'u32[144,128]{1,0:T(1,128)}', space=vmem, size = 0x12000, scoped, tag = 'internal scratch']
  #allocation2 [shape = 'f32[1,8,128]{2,1,0:T(8,128)}', space=vmem, size = 0x1000, scoped, tag = 'scratch operand']
  #allocation3 [shape = 'f32[1,8,128]{2,1,0:T(8,128)}', space=vmem, size = 0x1000, scoped, tag = 'scratch operand']
  %s0 = inlined_call_operand.hbm [shape: f32[2,4,2,128], index: 0, kind: input, shape index: {}]
  %s1 = inlined_call_operand.hbm [shape: f32[2,4,2,128], index: 1, kind: input, shape index: {}]
  %s2 = inlined_call_operand.hbm [shape: f32[2,8,128], index: 2, kind: output, shape index: {}]
  %s3 = sld [smem:[#allocation0]]
  $region57: #{tpu_custom_call.1} parent=0
    _
  %s5 = ssub.s32 1, %s3
  %s6 = scalar_select 0, %s5, %s3
  $region1: #{tpu_custom_call.1} parent=0
    #allocation4 [shape = 'u8[6144]{0}', space=vmem, size = 0x1800, scoped, tag = 'input window, operand 0']
    #allocation5 [shape = 's32[2]{0}', space=sflag, size = 0x8, scoped, tag = 'scoped memory for tpu_custom_call.1']
    #allocation6 [shape = 's32[2]{0}', space=sflag, size = 0x8, scoped, tag = 'scoped memory for tpu_custom_call.1']
    #allocation7 [shape = 'u8[6144]{0}', space=vmem, size = 0x1800, scoped, tag = 'input window, operand 1']
    #allocation8 [shape = 's32[2]{0}', space=sflag, size = 0x8, scoped, tag = 'scoped memory for tpu_custom_call.1']
    #allocation9 [shape = 'u8[8192]{0}', space=vmem, size = 0x2000, scoped, tag = 'output window, operand 0']
    %7 = vsyncpa [#allocation5], 0
    %s8 = scalar_lea.sflag [#allocation5], 1
    %9 = vsyncpa %s8, 0
    %10 = vsyncpa [#allocation8], 0
    %s11 = scalar_lea.sflag [#allocation8], 1
    %12 = vsyncpa %s11, 0
    %13 = vsyncpa [#allocation6], 0
    %s14 = scalar_lea.sflag [#allocation6], 1
    %15 = vsyncpa %s14, 0
    loop: start=0, step=1, limit=4
    $region2: #{tpu_custom_call.1} parent=1 // loop_pre_header
      _
    $region3: #{tpu_custom_call.1} parent=1 // loop_header
      %s17 = sphi 0, %s21
      %p18 = scmp.ge.s32.totalorder %s17, 4
      %s24 = sphi 0, %s36
      %s25 = sphi 0, %s32
      %s26 = sphi 0, %s24
      %s27 = sphi 0, %s25
      %s28 = sphi 0, %s26
      %s29 = sphi 0, %s27
      %s41 = sphi 0, %s43
      %s44 = sphi 0, %s41
      %s45 = sphi 0, %s44
      %s61 = sphi 0, %s45
      %s69 = sphi 0, %s71
      %s72 = sphi 0, %s69
      %s73 = sphi 0, %s72
      %s89 = sphi 0, %s73
      %s95 = sphi 0, %s97
      %s98 = sphi 0, %s95
      %s99 = sphi 0, %s98
      %s115 = sphi 0, %s99
    $region4: #{tpu_custom_call.1} parent=1 // loop_header_branch
      %20 = sbr.rel (%p18) target = $region8
    $region5: #{tpu_custom_call.1} parent=1 // loop_body
      %s22 = ssub.s32 %s17, 1
      %s23 = ssub.s32 %s17, 2
      %s30 = sadd.s32 1, %s25
      %p31 = scmp.ge.s32.totalorder %s30, 1
      %s32 = scalar_select %p31, 0, %s30
      %s33 = sadd.s32 1, %s24
      %s34 = scalar_select %p31, %s33, %s24
      %p35 = scmp.ge.s32.totalorder %s34, 2
      %s36 = scalar_select %p35, 0, %s34
      %s37 = ssub.s32 %s24, %s36
      %s38 = ssub.s32 %s25, %s32
      %s39 = sor.u32 %s37, %s38
      %p40 = scmp.eq.s32.totalorder %s39, 0
      %s42 = sadd.s32 %s41, 1
      %s43 = scalar_select %p40, %s41, %s42
      %p46 = pneg %p40
      %p47 = scmp.eq.s32.totalorder %s17, 1
      %p48 = por %p46, %p47
      %p49 = scmp.ne.s32.totalorder %s41, %s44
      %p50 = scmp.eq.s32.totalorder %s17, 0
      %p51 = por %p49, %p50
      %p52 = scmp.ne.s32.totalorder %s41, %s44
      %p53 = scmp.eq.s32.totalorder %s22, 1
      %p54 = por %p52, %p53
      %p55 = scmp.ne.s32.totalorder %s44, %s45
      %p56 = scmp.eq.s32.totalorder %s22, 0
      %p57 = por %p55, %p56
      %p58 = scmp.ne.s32.totalorder %s44, %s45
      %p59 = scmp.eq.s32.totalorder %s23, 1
      %p60 = por %p58, %p59
      %p62 = scmp.ne.s32.totalorder %s45, %s61
      %p63 = scmp.eq.s32.totalorder %s23, 0
      %p64 = por %p62, %p63
      %s65 = ssub.s32 %s24, %s36
      %s66 = ssub.s32 %s25, %s32
      %s67 = sor.u32 %s65, %s66
      %p68 = scmp.eq.s32.totalorder %s67, 0
      %s70 = sadd.s32 %s69, 1
      %s71 = scalar_select %p68, %s69, %s70
      %p74 = pneg %p68
      %p75 = scmp.eq.s32.totalorder %s17, 1
      %p76 = por %p74, %p75
      %p77 = scmp.ne.s32.totalorder %s69, %s72
      %p78 = scmp.eq.s32.totalorder %s17, 0
      %p79 = por %p77, %p78
      %p80 = scmp.ne.s32.totalorder %s69, %s72
      %p81 = scmp.eq.s32.totalorder %s22, 1
      %p82 = por %p80, %p81
      %p83 = scmp.ne.s32.totalorder %s72, %s73
      %p84 = scmp.eq.s32.totalorder %s22, 0
      %p85 = por %p83, %p84
      %p86 = scmp.ne.s32.totalorder %s72, %s73
      %p87 = scmp.eq.s32.totalorder %s23, 1
      %p88 = por %p86, %p87
      %p90 = scmp.ne.s32.totalorder %s73, %s89
      %p91 = scmp.eq.s32.totalorder %s23, 0
      %p92 = por %p90, %p91
      %s93 = ssub.s32 %s24, %s36
      %p94 = scmp.eq.s32.totalorder %s93, 0
      %s96 = sadd.s32 %s95, 1
      %s97 = scalar_select %p94, %s95, %s96
      %p100 = pneg %p94
      %p101 = scmp.eq.s32.totalorder %s17, 1
      %p102 = por %p100, %p101
      %p103 = scmp.ne.s32.totalorder %s95, %s98
      %p104 = scmp.eq.s32.totalorder %s17, 0
      %p105 = por %p103, %p104
      %p106 = scmp.ne.s32.totalorder %s95, %s98
      %p107 = scmp.eq.s32.totalorder %s22, 1
      %p108 = por %p106, %p107
      %p109 = scmp.ne.s32.totalorder %s98, %s99
      %p110 = scmp.eq.s32.totalorder %s22, 0
      %p111 = por %p109, %p110
      %p112 = scmp.ne.s32.totalorder %s98, %s99
      %p113 = scmp.eq.s32.totalorder %s23, 1
      %p114 = por %p112, %p113
      %p116 = scmp.ne.s32.totalorder %s99, %s115
      %p117 = scmp.eq.s32.totalorder %s23, 0
      %p118 = por %p116, %p117
      %p119 = scmp.le.s32.totalorder 1, %s17
      %p120 = scmp.lt.s32.totalorder %s17, 3
      %p121 = pnand %p119, %p120
      %p122 = pneg %p121
      // Predicated region
      $region9: #{tpu_custom_call.1} parent=5 // pred_check
        _
      $region10: #{tpu_custom_call.1} parent=5 // pred_check_branch
        %124 = sbr.rel (%p121) target = $region12
      $region11: #{tpu_custom_call.1} parent=5 // pred_region
        %s125 = ssub.s32 %s17, 1
      $region12: #{tpu_custom_call.1} parent=5 // pred_fallthru
        _
      %p126 = scmp.lt.s32.totalorder %s17, 2
      // Predicated region
      $region13: #{tpu_custom_call.1} parent=5 // pred_check
        %p127 = pneg %p126
      $region14: #{tpu_custom_call.1} parent=5 // pred_check_branch
        %129 = sbr.rel (%p127) target = $region16
      $region15: #{tpu_custom_call.1} parent=5 // pred_region
        // Predicated region
        $region17: #{tpu_custom_call.1} parent=15 // pred_check
          %p130 = pneg %p51
        $region18: #{tpu_custom_call.1} parent=15 // pred_check_branch
          %132 = sbr.rel (%p130) target = $region20
        $region19: #{tpu_custom_call.1} parent=15 // pred_region
          %s133 = sand.u32 %s41, 1
          %s134 = scalar_lea.sflag [#allocation5], %s133
          %s135 = sand.u32 %s41, 1
          %s136 = smul.addr %s135, 6
          %s137 = scalar_lea.vmem [#allocation4], %s136
          %s139 = ssub.s32 96, 96
          %140 = vsyncadd %s134, %s139
          %s141 = smul.addr %s24, 4
          %s142 = sadd.s32 %s25, %s141
          %s143 = smul.addr %s142, 32
          %s144 = scalar_lea.hbm %s0, %s143
          %s145 = sshll.u32 %s137, 4
          %s146 = int_to_ptr.vmem [resolvable:$true] %s145
          %151 = dma.hbm_to_vmem [thread:$0]  %s144, 96, %s146, %s134, 32, 32, 2
        $region20: #{tpu_custom_call.1} parent=15 // pred_fallthru
          _
        // Predicated region
        $region21: #{tpu_custom_call.1} parent=15 // pred_check
          %p152 = pneg %p79
        $region22: #{tpu_custom_call.1} parent=15 // pred_check_branch
          %154 = sbr.rel (%p152) target = $region24
        $region23: #{tpu_custom_call.1} parent=15 // pred_region
          %s155 = sand.u32 %s69, 1
          %s156 = scalar_lea.sflag [#allocation8], %s155
          %s157 = sand.u32 %s69, 1
          %s158 = smul.addr %s157, 6
          %s159 = scalar_lea.vmem [#allocation7], %s158
          %s161 = ssub.s32 96, 96
          %162 = vsyncadd %s156, %s161
          %s163 = smul.addr %s24, 4
          %s164 = sadd.s32 %s25, %s163
          %s165 = smul.addr %s164, 32
          %s166 = scalar_lea.hbm %s1, %s165
          %s167 = sshll.u32 %s159, 4
          %s168 = int_to_ptr.vmem [resolvable:$true] %s167
          %173 = dma.hbm_to_vmem [thread:$0]  %s166, 96, %s168, %s156, 32, 32, 2
        $region24: #{tpu_custom_call.1} parent=15 // pred_fallthru
          _
      $region16: #{tpu_custom_call.1} parent=5 // pred_fallthru
        _
      %p174 = scmp.le.s32.totalorder 1, %s17
      %p175 = scmp.lt.s32.totalorder %s17, 3
      %p176 = pnand %p174, %p175
      %p177 = pneg %p176
      // Predicated region
      $region25: #{tpu_custom_call.1} parent=5 // pred_check
        _
      $region26: #{tpu_custom_call.1} parent=5 // pred_check_branch
        %179 = sbr.rel (%p176) target = $region28
      $region27: #{tpu_custom_call.1} parent=5 // pred_region
        %s180 = ssub.s32 %s17, 1
        %s181 = sand.u32 %s44, 1
        %s182 = scalar_lea.sflag [#allocation5], %s181
        %s183 = sand.u32 %s44, 1
        %s184 = smul.addr %s183, 6
        %s185 = scalar_lea.vmem [#allocation4], %s184
        // Predicated region
        $region29: #{tpu_custom_call.1} parent=27 // pred_check
          %p186 = pneg %p57
        $region30: #{tpu_custom_call.1} parent=27 // pred_check_branch
          %188 = sbr.rel (%p186) target = $region32
        $region31: #{tpu_custom_call.1} parent=27 // pred_region
          %189 = dma.done %s182, 96
        $region32: #{tpu_custom_call.1} parent=27 // pred_fallthru
          _
        %s190 = sand.u32 %s72, 1
        %s191 = scalar_lea.sflag [#allocation8], %s190
        %s192 = sand.u32 %s72, 1
        %s193 = smul.addr %s192, 6
        %s194 = scalar_lea.vmem [#allocation7], %s193
        // Predicated region
        $region33: #{tpu_custom_call.1} parent=27 // pred_check
          %p195 = pneg %p85
        $region34: #{tpu_custom_call.1} parent=27 // pred_check_branch
          %197 = sbr.rel (%p195) target = $region36
        $region35: #{tpu_custom_call.1} parent=27 // pred_region
          %198 = dma.done %s191, 96
        $region36: #{tpu_custom_call.1} parent=27 // pred_fallthru
          _
        %s199 = sand.u32 %s44, 1
        %s200 = scalar_lea.sflag [#allocation5], %s199
        %s201 = sand.u32 %s44, 1
        %s202 = smul.addr %s201, 6
        %s203 = scalar_lea.vmem [#allocation4], %s202
        %p204 = pneg %p57
        %p205 = pneg %p54
        %s206 = sand.u32 %s72, 1
        %s207 = scalar_lea.sflag [#allocation8], %s206
        %s208 = sand.u32 %s72, 1
        %s209 = smul.addr %s208, 6
        %s210 = scalar_lea.vmem [#allocation7], %s209
        %p211 = pneg %p85
        %p212 = pneg %p82
        %p213 = pneg %p111
        %p214 = pneg %p108
        %s215 = sand.u32 %s98, 1
        %s216 = scalar_lea.sflag [#allocation6], %s215
        %s217 = sand.u32 %s98, 1
        %s218 = smul.addr %s217, 8
        %s219 = scalar_lea.vmem [#allocation9], %s218
        %p220 = scmp.eq.s32.totalorder %s27, 0
        // Predicated region
        $region37: #{tpu_custom_call.1} parent=27 // pred_check
          %p221 = pneg %p220
        $region38: #{tpu_custom_call.1} parent=27 // pred_check_branch
          %223 = sbr.rel (%p221) target = $region40
        $region39: #{tpu_custom_call.1} parent=27 // pred_region
          %224 = vst [vmem:[#allocation2] sm:$0xff] 0.0
          %225 = vst [vmem:[#allocation3] sm:$0xff] 0.0
        $region40: #{tpu_custom_call.1} parent=27 // pred_fallthru
          _
        %v226 = vld [vmem:[#allocation2] sm:$0xff]
        %v227 = vld [vmem:[%s185] sm:$0x3]
        %v228 = vld [vmem:[%s185 + $0x2] sm:$0x3]
        %v229 = vld [vmem:[%s185 + $0x4] sm:$0x3]
        %v230 = vmul.f32 %v227, 0.2
        %v231 = vmul.f32 %v228, 0.6
        %v232 = vadd.f32 %v230, %v231
        %v233 = vmul.f32 %v229, 0.1
        %v234 = vadd.f32 %v232, %v233
        %v235 = vpow.f32 %v234, 2.2
        %vm236 = vcmp.eq.f32.partialorder %v234, 0.0
        %v237 = vsel %vm236, 0.0, %v235
        %vm238 = vcmask 1041408
        %v239 = vsel %vm238, %v237, 0.0
        %v240 = vrot.slane %v239, 4
        %v241 = vadd.f32 %v239, %v240
        %v242 = vrot.slane %v241, 2
        %v243 = vadd.f32 %v241, %v242
        %v244 = vrot.slane %v243, 1
        %v245 = vadd.f32 %v243, %v244
        %v246 = vlaneseq
        %v247 = vshrl.u32 %v246, 7
        %vm248 = vcmp.eq.s32.totalorder %v247, 0
        %v249 = vsel %vm248, %v245, 0.0
        %v250 = vadd.f32 %v226, %v249
        %251 = vst [vmem:[#allocation2] sm:$0xff] %v250
        %v252 = vld [vmem:[#allocation3] sm:$0xff]
        %v253 = vld [vmem:[%s194] sm:$0x3]
        %v254 = vld [vmem:[%s194 + $0x2] sm:$0x3]
        %v255 = vld [vmem:[%s194 + $0x4] sm:$0x3]
        %v256 = vmul.f32 %v253, 0.2
        %v257 = vmul.f32 %v254, 0.6
        %v258 = vadd.f32 %v256, %v257
        %v259 = vmul.f32 %v255, 0.1
        %v260 = vadd.f32 %v258, %v259
        %v261 = vpow.f32 %v260, 2.2
        %vm262 = vcmp.eq.f32.partialorder %v260, 0.0
        %v263 = vsel %vm262, 0.0, %v261
        %v264 = vsel %vm238, %v263, 0.0
        %v265 = vrot.slane %v264, 4
        %v266 = vadd.f32 %v264, %v265
        %v267 = vrot.slane %v266, 2
        %v268 = vadd.f32 %v266, %v267
        %v269 = vrot.slane %v268, 1
        %v270 = vadd.f32 %v268, %v269
        %v271 = vsel %vm248, %v270, 0.0
        %v272 = vadd.f32 %v252, %v271
        %273 = vst [vmem:[#allocation3] sm:$0xff] %v272
        // Predicated region
        $region41: #{tpu_custom_call.1} parent=27 // pred_check
          %p274 = pneg %p220
        $region42: #{tpu_custom_call.1} parent=27 // pred_check_branch
          %276 = sbr.rel (%p274) target = $region44
        $region43: #{tpu_custom_call.1} parent=27 // pred_region
          %v277 = vld [vmem:[#allocation2] sm:$0xff]
          %278 = vadd.xlane.f32.xlu0 %v277
          %v279 = vpop.xlane.xlu0 %278
          %v280 = vrot.slane %v279, 4
          %v281 = vadd.f32 %v279, %v280
          %v282 = vrot.slane %v281, 2
          %v283 = vadd.f32 %v281, %v282
          %v284 = vrot.slane %v283, 1
          %v285 = vadd.f32 %v283, %v284
          %v286 = vld [vmem:[#allocation3] sm:$0xff]
          %287 = vadd.xlane.f32.xlu0 %v286
          %v288 = vpop.xlane.xlu0 %287
          %v289 = vrot.slane %v288, 4
          %v290 = vadd.f32 %v288, %v289
          %v291 = vrot.slane %v290, 2
          %v292 = vadd.f32 %v290, %v291
          %v293 = vrot.slane %v292, 1
          %v294 = vadd.f32 %v292, %v293
          %v295 = vadd.f32 %v285, 1e-06
          %v296 = vrcp.pop %v295
          %v297 = vmul.f32 %v294, %v296
          %v298 = vsub.f32 0.8, %v297
          %v299 = vand.u32 2147483647, %v298
          %300 = vst [vmem:[%s219] sm:$0xff] %v299
        $region44: #{tpu_custom_call.1} parent=27 // pred_fallthru
          _
        %s301 = sand.u32 %s98, 1
        %s302 = scalar_lea.sflag [#allocation6], %s301
        %s303 = sand.u32 %s98, 1
        %s304 = smul.addr %s303, 8
        %s305 = scalar_lea.vmem [#allocation9], %s304
        // Predicated region
        $region45: #{tpu_custom_call.1} parent=27 // pred_check
          %p306 = pneg %p108
        $region46: #{tpu_custom_call.1} parent=27 // pred_check_branch
          %308 = sbr.rel (%p306) target = $region48
        $region47: #{tpu_custom_call.1} parent=27 // pred_region
          %s310 = ssub.s32 128, 128
          %311 = vsyncadd %s302, %s310
          %s312 = smul.addr %s26, 128
          %s313 = scalar_lea.hbm %s2, %s312
          %s315 = sshll.u32 %s305, 4
          %s316 = int_to_ptr.vmem [resolvable:$true] %s315
          %318 = dma.vmem_to_hbm [thread:$0]  %s316, 128, %s313, %s302
        $region48: #{tpu_custom_call.1} parent=27 // pred_fallthru
          _
      $region28: #{tpu_custom_call.1} parent=5 // pred_fallthru
        _
      %p319 = scmp.le.s32.totalorder 2, %s17
      // Predicated region
      $region49: #{tpu_custom_call.1} parent=5 // pred_check
        %p320 = pneg %p319
      $region50: #{tpu_custom_call.1} parent=5 // pred_check_branch
        %322 = sbr.rel (%p320) target = $region52
      $region51: #{tpu_custom_call.1} parent=5 // pred_region
        %s323 = ssub.s32 %s17, 2
        // Predicated region
        $region53: #{tpu_custom_call.1} parent=51 // pred_check
          %p324 = pneg %p114
        $region54: #{tpu_custom_call.1} parent=51 // pred_check_branch
          %326 = sbr.rel (%p324) target = $region56
        $region55: #{tpu_custom_call.1} parent=51 // pred_region
          %s327 = sand.u32 %s99, 1
          %s328 = scalar_lea.sflag [#allocation6], %s327
          %s329 = sand.u32 %s99, 1
          %s330 = smul.addr %s329, 8
          %s331 = scalar_lea.vmem [#allocation9], %s330
          %332 = dma.done %s328, 128
        $region56: #{tpu_custom_call.1} parent=51 // pred_fallthru
          _
      $region52: #{tpu_custom_call.1} parent=5 // pred_fallthru
        _
    $region6: #{tpu_custom_call.1} parent=1 // loop_footer
      %s21 = sadd.s32 1, %s17
    $region7: #{tpu_custom_call.1} parent=1 // loop_footer_branch
      %16 = sbr.rel target = $region3
    $region8: #{tpu_custom_call.1} parent=1 // loop_exit
      _
    %333 = vsyncpa [#allocation5], 1
    %s334 = scalar_lea.sflag [#allocation5], 1
    %335 = vsyncpa %s334, 1
    %336 = vsyncpa [#allocation8], 1
    %s337 = scalar_lea.sflag [#allocation8], 1
    %338 = vsyncpa %s337, 1
    %339 = vsyncpa [#allocation6], 1
    %s340 = scalar_lea.sflag [#allocation6], 1
    %341 = vsyncpa %s340, 1

</llo_original>
